<compile_context>
chip_gen: v6e
topology: v6e:2x2x1
jax: 0.10.0
libtpu: 0.0.40
codegen_flags: <defaults>
</compile_context>

<pallas_src>
import functools

import jax
import jax.numpy as jnp
import numpy as np
from jax.experimental import pallas as pl
from jax.experimental.pallas import tpu as pltpu


# --------------------------------------------------------------------------- #
# Host-side constants (hoisted out of the kernel per perf review)              #
# --------------------------------------------------------------------------- #
def _make_conv_consts(H, W):
    """(4, HW) f32: [left-edge mask, right-edge mask, x grid, y grid]."""
    HW = H * W
    colw = jnp.arange(HW, dtype=jnp.int32) % W
    mask_l = (colw != 0).astype(jnp.float32)          # zero where kw=0 tap wraps
    mask_r = (colw != (W - 1)).astype(jnp.float32)    # zero where kw=2 tap wraps
    xc = jnp.linspace(-W / 2, W / 2, W, dtype=jnp.float32)
    yc = jnp.linspace(-H / 2, H / 2, H, dtype=jnp.float32)
    xg = jnp.tile(xc, H)
    yg = jnp.repeat(yc, W)
    return jnp.stack([mask_l, mask_r, xg, yg], axis=0)


def _make_centroid_grid(H, W):
    """(2, HW) f32: [x grid, y grid] (torch linspace convention)."""
    xc = jnp.linspace(-W / 2, W / 2, W, dtype=jnp.float32)
    yc = jnp.linspace(-H / 2, H / 2, H, dtype=jnp.float32)
    return jnp.stack([jnp.tile(xc, H), jnp.repeat(yc, W)], axis=0)


# --------------------------------------------------------------------------- #
# Fused kernel: Conv2d(Cin, Cout, 3, padding=1) + ReLU + mass_centroid         #
# --------------------------------------------------------------------------- #
def _conv_relu_centroid_kernel(x_ref, w_ref, const_ref, heat_ref, cent_ref,
                               *, H, W):
    # x_ref:    (1, Cin, HW + 2W)   flat image, padded by W zeros each side
    # w_ref:    (Cout, 9*Cin + 1)   tap-major weights, bias as last column
    # const_ref:(4, HW)             [mask_left, mask_right, x_grid, y_grid]
    # heat_ref: (1, Cout, HW)       lane-dense heatmap
    # cent_ref: (1, Cout, 2)        (x_centroid, y_centroid)
    HW = H * W

    mask_l = const_ref[0:1, :]
    mask_r = const_ref[1:2, :]
    xg = const_ref[2:3, :]
    yg = const_ref[3:4, :]

    # Build the stacked im2col block (9*Cin + 1, HW): 3 lane slices + 6 rolls.
    rows = []
    for kh in range(3):
        base = x_ref[0, :, kh * W:kh * W + HW]                 # (Cin, HW) kw=1
        left = pltpu.roll(base, 1, 1) * mask_l                 # kw=0 tap
        right = pltpu.roll(base, HW - 1, 1) * mask_r           # kw=2 tap
        rows += [left, base, right]
    rows.append(jnp.ones((1, HW), dtype=jnp.float32))          # bias row
    xs = jnp.concatenate(rows, axis=0)                         # (9*Cin+1, HW)

    # Single stacked MXU matmul (bias folded in), then ReLU.
    heat = jnp.maximum(
        jnp.dot(w_ref[...], xs, preferred_element_type=jnp.float32), 0.0)
    heat_ref[0] = heat                                         # (Cout, HW)

    # Mass centroid: lane-axis reductions, EUP reciprocal, single 2-lane store.
    inv_mass = pl.reciprocal(jnp.sum(heat, axis=1, keepdims=True) + 1e-8,
                             approx=True)                      # (Cout, 1)
    cx = jnp.sum(heat * xg, axis=1, keepdims=True) * inv_mass
    cy = jnp.sum(heat * yg, axis=1, keepdims=True) * inv_mass
    cent_ref[0] = jnp.concatenate([cx, cy], axis=1)            # (Cout, 2)


def conv_relu_centroid(x, weight, bias):
    """x: (B,Cin,H,W), weight: (Cout,Cin,3,3), bias: (Cout,)
    -> heat (B,Cout,H,W), centroids (B,Cout,2)."""
    B, Cin, H, W = x.shape
    Cout = weight.shape[0]
    HW = H * W
    L = HW + 2 * W
    # Flat-padded image: padded index kh*W + p holds the (kh,kw=1) tap pixel.
    x_flat = jnp.pad(x.reshape(B, Cin, HW).astype(jnp.float32),
                     ((0, 0), (0, 0), (W, W)))
    # Tap-major weights (kh, kw) blocks of Cin columns, bias as extra column.
    w2d = weight.astype(jnp.float32).transpose(0, 2, 3, 1).reshape(Cout, 9 * Cin)
    w_stack = jnp.concatenate(
        [w2d, bias.astype(jnp.float32).reshape(Cout, 1)], axis=1)
    const = _make_conv_consts(H, W)

    kern = functools.partial(_conv_relu_centroid_kernel, H=H, W=W)
    heat_flat, cents = pl.pallas_call(
        kern,
        out_shape=(jax.ShapeDtypeStruct((B, Cout, HW), jnp.float32),
                   jax.ShapeDtypeStruct((B, Cout, 2), jnp.float32)),
        grid=(B,),
        in_specs=[
            pl.BlockSpec((1, Cin, L), lambda b: (b, 0, 0)),
            pl.BlockSpec((Cout, 9 * Cin + 1), lambda b: (0, 0)),
            pl.BlockSpec((4, HW), lambda b: (0, 0)),
        ],
        out_specs=(
            pl.BlockSpec((1, Cout, HW), lambda b: (b, 0, 0)),
            pl.BlockSpec((1, Cout, 2), lambda b: (b, 0, 0)),
        ),
        compiler_params=pltpu.CompilerParams(dimension_semantics=("parallel",)),
    )(x_flat, w_stack, const)
    return heat_flat.reshape(B, Cout, H, W), cents


# --------------------------------------------------------------------------- #
# Standalone mass_centroid (only for heatmaps NOT produced by the fused call)  #
# --------------------------------------------------------------------------- #
def _centroid_kernel(t_ref, grid_ref, cent_ref):
    # t_ref: (1, C, HW)  grid_ref: (2, HW)  cent_ref: (1, C, 2)
    t = t_ref[0]
    xg = grid_ref[0:1, :]
    yg = grid_ref[1:2, :]
    inv_mass = pl.reciprocal(jnp.sum(t, axis=1, keepdims=True) + 1e-8,
                             approx=True)
    cx = jnp.sum(t * xg, axis=1, keepdims=True) * inv_mass
    cy = jnp.sum(t * yg, axis=1, keepdims=True) * inv_mass
    cent_ref[0] = jnp.concatenate([cx, cy], axis=1)


def mass_centroid(t):
    """t: (B, C, H, W) -> centroids (B, C, 2) (matches torch reference)."""
    B, C, H, W = t.shape
    HW = H * W
    t_flat = t.reshape(B, C, HW).astype(jnp.float32)   # free reshape
    grid_const = _make_centroid_grid(H, W)
    return pl.pallas_call(
        _centroid_kernel,
        out_shape=jax.ShapeDtypeStruct((B, C, 2), jnp.float32),
        grid=(B,),
        in_specs=[pl.BlockSpec((1, C, HW), lambda b: (b, 0, 0)),
                  pl.BlockSpec((2, HW), lambda b: (0, 0))],
        out_specs=pl.BlockSpec((1, C, 2), lambda b: (b, 0, 0)),
        compiler_params=pltpu.CompilerParams(dimension_semantics=("parallel",)),
    )(t_flat, grid_const)


# --------------------------------------------------------------------------- #
# inverse_rotation / inverse_translation — plain jnp (tiny, launch-dominated)  #
# --------------------------------------------------------------------------- #
def inverse_rotation(preds, angles):
    rad = angles.astype(jnp.float32) * (jnp.pi / 180.0)
    c, s = jnp.cos(rad), jnp.sin(rad)
    x = c * preds[:, 0] - s * preds[:, 1]
    y = s * preds[:, 0] + c * preds[:, 1]
    return jnp.stack([x, y], axis=-1)


def inverse_translation(preds, applied_translation):
    return preds - applied_translation


# --------------------------------------------------------------------------- #
# Localizer                                                                    #
# --------------------------------------------------------------------------- #
class Localizer:
    """JAX/Pallas port of my_classes.my_networks.Localizer.

    The wrapped `model` is a deterministic synthetic heatmap model
    (Conv2d(Cin, Cout, 3, padding=1) + ReLU) fused with the centroid
    reduction in a single Pallas kernel.
    """

    def __init__(self, weight, bias, n_transforms=8):
        self.weight = weight
        self.bias = bias
        self.n_transforms = n_transforms

    def forward(self, x):
        # PyTorch: return self.model(x) -> heatmap
        heat, _ = conv_relu_centroid(x, self.weight, self.bias)
        return heat

    def forward_with_centroids(self, x):
        # Fused path: use these centroids directly; do NOT re-run
        # mass_centroid on the returned heatmap.
        return conv_relu_centroid(x, self.weight, self.bias)

    def inverse_tranform(self, pred, translation, angles):
        return inverse_translation(inverse_rotation(pred, angles), translation)

    # TODO(synk): forward_tranform / get_loss need torchvision-style image
    # rotate/translate warps (and torch RNG); those warps are not implemented.


# --------------------------------------------------------------------------- #
# demo / correctness check                                                     #
# --------------------------------------------------------------------------- #
if __name__ == "__main__":
    key = jax.random.PRNGKey(0)
    kx, kw_, kb, kt, ka = jax.random.split(key, 5)

    B, Cin, H, W = 2, 4, 16, 16
    Cout = 1  # heatmap channel

    x = jax.random.normal(kx, (B, Cin, H, W), dtype=jnp.float32)
    weight = jax.random.normal(kw_, (Cout, Cin, 3, 3), dtype=jnp.float32) * 0.1
    bias = jax.random.normal(kb, (Cout,), dtype=jnp.float32) * 0.1

    loc = Localizer(weight, bias, n_transforms=8)

    # --- fused forward: heatmap + centroids ---
    heat, cents = loc.forward_with_centroids(x)
    heat = jax.block_until_ready(heat)
    cents = jax.block_until_ready(cents)

    # reference conv+relu
    ref_heat = jax.lax.conv_general_dilated(
        x, weight, window_strides=(1, 1), padding="SAME",
        dimension_numbers=("NCHW", "OIHW", "NCHW"))
    ref_heat = jnp.maximum(ref_heat + bias[None, :, None, None], 0.0)
    np.testing.assert_allclose(np.asarray(heat), np.asarray(ref_heat),
                               atol=1e-4, rtol=1e-4)

    # reference centroids (mirrors the torch mass_centroid)
    yc = jnp.linspace(-H / 2, H / 2, H)
    xc = jnp.linspace(-W / 2, W / 2, W)
    ygrid, xgrid = jnp.meshgrid(yc, xc, indexing="ij")
    mass = jnp.sum(ref_heat, axis=(-2, -1)) + 1e-8
    rx = jnp.sum(ref_heat * xgrid[None, None], axis=(-2, -1)) / mass
    ry = jnp.sum(ref_heat * ygrid[None, None], axis=(-2, -1)) / mass
    ref_cents = jnp.stack([rx, ry], axis=-1)
    np.testing.assert_allclose(np.asarray(cents), np.asarray(ref_cents),
                               atol=1e-3, rtol=1e-3)

    # standalone mass_centroid kernel (correctness check only; the fused call
    # already returns centroids, so production code should not re-run this)
    cents2 = jax.block_until_ready(mass_centroid(ref_heat))
    np.testing.assert_allclose(np.asarray(cents2), np.asarray(ref_cents),
                               atol=1e-3, rtol=1e-3)

    # --- inverse_tranform (inverse_rotation + inverse_translation) ---
    pred = cents.reshape(B, 2)
    translation = jax.random.uniform(kt, (B, 2), dtype=jnp.float32) * (H // 3) - (H // 6)
    angles = jax.random.uniform(ka, (B,), dtype=jnp.float32) * 360.0
    inv = jax.block_until_ready(loc.inverse_tranform(pred, translation, angles))

    rad = angles * (jnp.pi / 180.0)
    c, s = jnp.cos(rad), jnp.sin(rad)
    R = jnp.stack([jnp.stack([c, -s], axis=1), jnp.stack([s, c], axis=1)], axis=1)
    ref_inv = jnp.einsum("bij,bj->bi", R, pred) - translation
    np.testing.assert_allclose(np.asarray(inv), np.asarray(ref_inv),
                               atol=1e-4, rtol=1e-4)

    print("KERNEL_OK")
</pallas_src>

<mosaic_0001>
module attributes {stable_mosaic.version = 11 : i64} {
  func.func @_conv_relu_centroid_kernel(%arg0: i32, %arg1: memref<1x4x288xf32, #tpu.memory_space<vmem>>, %arg2: memref<1x37xf32, #tpu.memory_space<vmem>>, %arg3: memref<4x256xf32, #tpu.memory_space<vmem>>, %arg4: memref<1x1x256xf32, #tpu.memory_space<vmem>>, %arg5: memref<1x1x2xf32, #tpu.memory_space<vmem>>) attributes {dimension_semantics = [#tpu.dimension_semantics<parallel>], iteration_bounds = array<i64: 2>, scalar_prefetch = 0 : i64, scratch_operands = 0 : i64, tpu.core_type = #tpu.core_type<tc>, window_params = [{transform_indices = @transform_0, window_bounds = array<i64: 1, 4, 288>}, {pipeline_mode = #tpu.pipeline_mode<synchronous>, transform_indices = @transform_1, window_bounds = array<i64: 1, 37>}, {pipeline_mode = #tpu.pipeline_mode<synchronous>, transform_indices = @transform_2, window_bounds = array<i64: 4, 256>}, {transform_indices = @transform_3, window_bounds = array<i64: 1, 1, 256>}, {transform_indices = @transform_4, window_bounds = array<i64: 1, 1, 2>}]} {
    %c0 = arith.constant 0 : index
    %c0_0 = arith.constant 0 : index
    %0 = vector.load %arg3[%c0, %c0_0] : memref<4x256xf32, #tpu.memory_space<vmem>>, vector<1x256xf32>
    %c1 = arith.constant 1 : index
    %c0_1 = arith.constant 0 : index
    %1 = vector.load %arg3[%c1, %c0_1] : memref<4x256xf32, #tpu.memory_space<vmem>>, vector<1x256xf32>
    %c2 = arith.constant 2 : index
    %c0_2 = arith.constant 0 : index
    %2 = vector.load %arg3[%c2, %c0_2] : memref<4x256xf32, #tpu.memory_space<vmem>>, vector<1x256xf32>
    %c3 = arith.constant 3 : index
    %c0_3 = arith.constant 0 : index
    %3 = vector.load %arg3[%c3, %c0_3] : memref<4x256xf32, #tpu.memory_space<vmem>>, vector<1x256xf32>
    %c0_4 = arith.constant 0 : index
    %c0_5 = arith.constant 0 : index
    %c0_6 = arith.constant 0 : index
    %4 = vector.load %arg1[%c0_4, %c0_5, %c0_6] : memref<1x4x288xf32, #tpu.memory_space<vmem>>, vector<1x4x256xf32>
    %5 = vector.shape_cast %4 : vector<1x4x256xf32> to vector<4x256xf32>
    %c1_i32 = arith.constant 1 : i32
    %6 = tpu.dynamic_rotate %5 by %c1_i32 dim 1 : vector<4x256xf32>, i32 -> vector<4x256xf32>
    %7 = vector.broadcast %0 : vector<1x256xf32> to vector<4x256xf32>
    %8 = arith.mulf %6, %7 : vector<4x256xf32>
    %c255_i32 = arith.constant 255 : i32
    %9 = tpu.dynamic_rotate %5 by %c255_i32 dim 1 : vector<4x256xf32>, i32 -> vector<4x256xf32>
    %10 = vector.broadcast %1 : vector<1x256xf32> to vector<4x256xf32>
    %11 = arith.mulf %9, %10 : vector<4x256xf32>
    %c0_7 = arith.constant 0 : index
    %c0_8 = arith.constant 0 : index
    %c16 = arith.constant 16 : index
    %12 = vector.load %arg1[%c0_7, %c0_8, %c16] : memref<1x4x288xf32, #tpu.memory_space<vmem>>, vector<1x4x256xf32>
    %13 = vector.shape_cast %12 : vector<1x4x256xf32> to vector<4x256xf32>
    %c1_i32_9 = arith.constant 1 : i32
    %14 = tpu.dynamic_rotate %13 by %c1_i32_9 dim 1 : vector<4x256xf32>, i32 -> vector<4x256xf32>
    %15 = vector.broadcast %0 : vector<1x256xf32> to vector<4x256xf32>
    %16 = arith.mulf %14, %15 : vector<4x256xf32>
    %c255_i32_10 = arith.constant 255 : i32
    %17 = tpu.dynamic_rotate %13 by %c255_i32_10 dim 1 : vector<4x256xf32>, i32 -> vector<4x256xf32>
    %18 = vector.broadcast %1 : vector<1x256xf32> to vector<4x256xf32>
    %19 = arith.mulf %17, %18 : vector<4x256xf32>
    %c0_11 = arith.constant 0 : index
    %c0_12 = arith.constant 0 : index
    %c32 = arith.constant 32 : index
    %20 = vector.load %arg1[%c0_11, %c0_12, %c32] : memref<1x4x288xf32, #tpu.memory_space<vmem>>, vector<1x4x256xf32>
    %21 = vector.shape_cast %20 : vector<1x4x256xf32> to vector<4x256xf32>
    %c1_i32_13 = arith.constant 1 : i32
    %22 = tpu.dynamic_rotate %21 by %c1_i32_13 dim 1 : vector<4x256xf32>, i32 -> vector<4x256xf32>
    %23 = vector.broadcast %0 : vector<1x256xf32> to vector<4x256xf32>
    %24 = arith.mulf %22, %23 : vector<4x256xf32>
    %c255_i32_14 = arith.constant 255 : i32
    %25 = tpu.dynamic_rotate %21 by %c255_i32_14 dim 1 : vector<4x256xf32>, i32 -> vector<4x256xf32>
    %26 = vector.broadcast %1 : vector<1x256xf32> to vector<4x256xf32>
    %27 = arith.mulf %25, %26 : vector<4x256xf32>
    %cst = arith.constant 1.000000e+00 : f32
    %28 = vector.broadcast %cst : f32 to vector<1x256xf32>
    %29 = tpu.concatenate %8, %5, %11, %16, %13, %19, %24, %21, %27, %28 in 0 : vector<4x256xf32>, vector<4x256xf32>, vector<4x256xf32>, vector<4x256xf32>, vector<4x256xf32>, vector<4x256xf32>, vector<4x256xf32>, vector<4x256xf32>, vector<4x256xf32>, vector<1x256xf32> -> vector<37x256xf32>
    %c0_15 = arith.constant 0 : index
    %c0_16 = arith.constant 0 : index
    %30 = vector.load %arg2[%c0_15, %c0_16] : memref<1x37xf32, #tpu.memory_space<vmem>>, vector<1x37xf32>
    %cst_17 = arith.constant dense<0.000000e+00> : vector<1x256xf32>
    %31 = tpu.matmul %30, %29, %cst_17 {dimension_numbers = #tpu.dot_dimension_numbers<[1], [0], [0], [1], [0, 0, 1, 1], [], []>} : vector<1x37xf32>, vector<37x256xf32>, vector<1x256xf32> -> vector<1x256xf32>
    %cst_18 = arith.constant 0.000000e+00 : f32
    %32 = vector.broadcast %cst_18 : f32 to vector<1x256xf32>
    %33 = arith.maximumf %31, %32 : vector<1x256xf32>
    %c0_19 = arith.constant 0 : index
    %c0_20 = arith.constant 0 : index
    %c0_21 = arith.constant 0 : index
    %34 = vector.load %arg4[%c0_19, %c0_20, %c0_21] : memref<1x1x256xf32, #tpu.memory_space<vmem>>, vector<1x1x256xf32>
    %35 = vector.shape_cast %34 : vector<1x1x256xf32> to vector<1x256xf32>
    %36 = vector.shape_cast %33 : vector<1x256xf32> to vector<1x1x256xf32>
    tpu.vector_store %arg4[%c0_19, %c0_20, %c0_21], %36 {strides = array<i32>} : memref<1x1x256xf32, #tpu.memory_space<vmem>>, vector<1x1x256xf32>,
    %cst_22 = arith.constant dense<0.000000e+00> : vector<1xf32>
    %37 = vector.multi_reduction <add>, %33, %cst_22 [1] : vector<1x256xf32> to vector<1xf32>
    %38 = vector.shape_cast %37 : vector<1xf32> to vector<1x1xf32>
    %cst_23 = arith.constant 9.99999993E-9 : f32
    %39 = vector.broadcast %cst_23 : f32 to vector<1x1xf32>
    %40 = arith.addf %38, %39 : vector<1x1xf32>
    %41 = tpu.reciprocal %40 {approx = true} : vector<1x1xf32> -> vector<1x1xf32>
    %42 = arith.mulf %33, %2 : vector<1x256xf32>
    %cst_24 = arith.constant dense<0.000000e+00> : vector<1xf32>
    %43 = vector.multi_reduction <add>, %42, %cst_24 [1] : vector<1x256xf32> to vector<1xf32>
    %44 = vector.shape_cast %43 : vector<1xf32> to vector<1x1xf32>
    %45 = arith.mulf %44, %41 : vector<1x1xf32>
    %46 = arith.mulf %33, %3 : vector<1x256xf32>
    %cst_25 = arith.constant dense<0.000000e+00> : vector<1xf32>
    %47 = vector.multi_reduction <add>, %46, %cst_25 [1] : vector<1x256xf32> to vector<1xf32>
    %48 = vector.shape_cast %47 : vector<1xf32> to vector<1x1xf32>
    %49 = arith.mulf %48, %41 : vector<1x1xf32>
    %50 = tpu.concatenate %45, %49 in 1 : vector<1x1xf32>, vector<1x1xf32> -> vector<1x2xf32>
    %c0_26 = arith.constant 0 : index
    %c0_27 = arith.constant 0 : index
    %c0_28 = arith.constant 0 : index
    %51 = vector.load %arg5[%c0_26, %c0_27, %c0_28] : memref<1x1x2xf32, #tpu.memory_space<vmem>>, vector<1x1x2xf32>
    %52 = vector.shape_cast %51 : vector<1x1x2xf32> to vector<1x2xf32>
    %53 = vector.shape_cast %50 : vector<1x2xf32> to vector<1x1x2xf32>
    tpu.vector_store %arg5[%c0_26, %c0_27, %c0_28], %53 {strides = array<i32>} : memref<1x1x2xf32, #tpu.memory_space<vmem>>, vector<1x1x2xf32>,
    return
  }
  func.func @transform_0(%arg0: i32) -> (i32, i32, i32) {
    %c0_i32 = arith.constant 0 : i32
    %c0_i32_0 = arith.constant 0 : i32
    %c0_i32_1 = arith.constant 0 : i32
    return %arg0, %c0_i32, %c0_i32_0 : i32, i32, i32
  }
  func.func @transform_1(%arg0: i32) -> (i32, i32) {
    %c0_i32 = arith.constant 0 : i32
    %c0_i32_0 = arith.constant 0 : i32
    %c0_i32_1 = arith.constant 0 : i32
    return %c0_i32, %c0_i32_0 : i32, i32
  }
  func.func @transform_2(%arg0: i32) -> (i32, i32) {
    %c0_i32 = arith.constant 0 : i32
    %c0_i32_0 = arith.constant 0 : i32
    %c0_i32_1 = arith.constant 0 : i32
    return %c0_i32, %c0_i32_0 : i32, i32
  }
  func.func @transform_3(%arg0: i32) -> (i32, i32, i32) {
    %c0_i32 = arith.constant 0 : i32
    %c0_i32_0 = arith.constant 0 : i32
    %c0_i32_1 = arith.constant 0 : i32
    return %arg0, %c0_i32, %c0_i32_0 : i32, i32, i32
  }
  func.func @transform_4(%arg0: i32) -> (i32, i32, i32) {
    %c0_i32 = arith.constant 0 : i32
    %c0_i32_0 = arith.constant 0 : i32
    %c0_i32_1 = arith.constant 0 : i32
    return %arg0, %c0_i32, %c0_i32_0 : i32, i32, i32
  }
}

</mosaic_0001>

<llo_original>
// kernel: tpu_custom_call.1
$region0: #{tpu_custom_call.1}
  #allocation0 [shape = 'u32[]', space=smem, size = 0x4, offset = 0x4, fixed_abs, tag = 'smem constant byte address 0x4 - core index']
  #allocation1 [shape = 'u32[144,128]{1,0:T(1,128)}', space=vmem, size = 0x12000, scoped, tag = 'internal scratch']
  %s0 = inlined_call_operand.hbm [shape: f32[2,4,288], index: 0, kind: input, shape index: {}]
  %s1 = inlined_call_operand.vmem [shape: f32[1,37], index: 1, kind: input, shape index: {}]
  %s2 = inlined_call_operand.hbm [shape: f32[4,256], index: 2, kind: input, shape index: {}]
  %s3 = inlined_call_operand.hbm [shape: f32[2,1,256], index: 3, kind: output, shape index: {0}]
  %s4 = inlined_call_operand.hbm [shape: f32[2,1,2], index: 4, kind: output, shape index: {1}]
  %5 = xla_tuple %s3, %s4
  %s6 = sld [smem:[#allocation0]]
  $region61: #{tpu_custom_call.1} parent=0
    _
  %s8 = ssub.s32 1, %s6
  %s9 = scalar_select 0, %s8, %s6
  $region1: #{tpu_custom_call.1} parent=0
    #allocation2 [shape = 'u8[12288]{0}', space=vmem, size = 0x3000, scoped, tag = 'input window, operand 0']
    #allocation3 [shape = 's32[2]{0}', space=sflag, size = 0x8, scoped, tag = 'scoped memory for tpu_custom_call.1']
    #allocation4 [shape = 's32[2]{0}', space=sflag, size = 0x8, scoped, tag = 'scoped memory for tpu_custom_call.1']
    #allocation5 [shape = 'u8[4096]{0}', space=vmem, size = 0x1000, scoped, tag = 'input window, operand 2, single buffered']
    #allocation6 [shape = 's32[1]{0}', space=sflag, size = 0x4, scoped, tag = 'scoped memory for tpu_custom_call.1']
    #allocation7 [shape = 'u8[2048]{0}', space=vmem, size = 0x800, scoped, tag = 'output window, operand 0']
    #allocation8 [shape = 'u8[1024]{0}', space=vmem, size = 0x400, scoped, tag = 'output window, operand 1']
    #allocation9 [shape = 's32[2]{0}', space=sflag, size = 0x8, scoped, tag = 'scoped memory for tpu_custom_call.1']
    %10 = vsyncpa [#allocation3], 0
    %s11 = scalar_lea.sflag [#allocation3], 1
    %12 = vsyncpa %s11, 0
    %13 = vsyncpa [#allocation6], 0
    %14 = vsyncpa [#allocation4], 0
    %s15 = scalar_lea.sflag [#allocation4], 1
    %16 = vsyncpa %s15, 0
    %17 = vsyncpa [#allocation9], 0
    %s18 = scalar_lea.sflag [#allocation9], 1
    %19 = vsyncpa %s18, 0
    loop: start=0, step=1, limit=4
    $region2: #{tpu_custom_call.1} parent=1 // loop_pre_header
      _
    $region3: #{tpu_custom_call.1} parent=1 // loop_header
      %s21 = sphi 0, %s25
      %p22 = scmp.ge.s32.totalorder %s21, 4
      %s31 = sphi 0, %s33
      %s34 = sphi 0, %s31
      %s35 = sphi 0, %s34
      %s51 = sphi 0, %s35
      %s55 = sphi 0, %s55
      %s57 = sphi 0, %s55
      %s58 = sphi 0, %s57
      %s72 = sphi 0, %s58
      %s76 = sphi 0, %s76
      %s78 = sphi 0, %s76
      %s79 = sphi 0, %s78
      %s93 = sphi 0, %s79
      %s99 = sphi 0, %s101
      %s102 = sphi 0, %s99
      %s103 = sphi 0, %s102
      %s119 = sphi 0, %s103
      %s125 = sphi 0, %s127
      %s128 = sphi 0, %s125
      %s129 = sphi 0, %s128
      %s145 = sphi 0, %s129
    $region4: #{tpu_custom_call.1} parent=1 // loop_header_branch
      %24 = sbr.rel (%p22) target = $region8
    $region5: #{tpu_custom_call.1} parent=1 // loop_body
      %s26 = ssub.s32 %s21, 1
      %s27 = ssub.s32 %s21, 2
      %s28 = sadd.s32 %s21, 1
      %s29 = ssub.s32 %s21, %s28
      %p30 = scmp.eq.s32.totalorder %s29, 0
      %s32 = sadd.s32 %s31, 1
      %s33 = scalar_select %p30, %s31, %s32
      %p36 = pneg %p30
      %p37 = scmp.eq.s32.totalorder %s21, 1
      %p38 = por %p36, %p37
      %p39 = scmp.ne.s32.totalorder %s31, %s34
      %p40 = scmp.eq.s32.totalorder %s21, 0
      %p41 = por %p39, %p40
      %p42 = scmp.ne.s32.totalorder %s31, %s34
      %p43 = scmp.eq.s32.totalorder %s26, 1
      %p44 = por %p42, %p43
      %p45 = scmp.ne.s32.totalorder %s34, %s35
      %p46 = scmp.eq.s32.totalorder %s26, 0
      %p47 = por %p45, %p46
      %p48 = scmp.ne.s32.totalorder %s34, %s35
      %p49 = scmp.eq.s32.totalorder %s27, 1
      %p50 = por %p48, %p49
      %p52 = scmp.ne.s32.totalorder %s35, %s51
      %p53 = scmp.eq.s32.totalorder %s27, 0
      %p54 = por %p52, %p53
      %s56 = sadd.s32 %s55, 1
      %p59 = scmp.eq.s32.totalorder %s21, 1
      %p60 = scmp.ne.s32.totalorder %s55, %s57
      %p61 = scmp.eq.s32.totalorder %s21, 0
      %p62 = por %p60, %p61
      %p63 = scmp.ne.s32.totalorder %s55, %s57
      %p64 = scmp.eq.s32.totalorder %s26, 1
      %p65 = por %p63, %p64
      %p66 = scmp.ne.s32.totalorder %s57, %s58
      %p67 = scmp.eq.s32.totalorder %s26, 0
      %p68 = por %p66, %p67
      %p69 = scmp.ne.s32.totalorder %s57, %s58
      %p70 = scmp.eq.s32.totalorder %s27, 1
      %p71 = por %p69, %p70
      %p73 = scmp.ne.s32.totalorder %s58, %s72
      %p74 = scmp.eq.s32.totalorder %s27, 0
      %p75 = por %p73, %p74
      %s77 = sadd.s32 %s76, 1
      %p80 = scmp.eq.s32.totalorder %s21, 1
      %p81 = scmp.ne.s32.totalorder %s76, %s78
      %p82 = scmp.eq.s32.totalorder %s21, 0
      %p83 = por %p81, %p82
      %p84 = scmp.ne.s32.totalorder %s76, %s78
      %p85 = scmp.eq.s32.totalorder %s26, 1
      %p86 = por %p84, %p85
      %p87 = scmp.ne.s32.totalorder %s78, %s79
      %p88 = scmp.eq.s32.totalorder %s26, 0
      %p89 = por %p87, %p88
      %p90 = scmp.ne.s32.totalorder %s78, %s79
      %p91 = scmp.eq.s32.totalorder %s27, 1
      %p92 = por %p90, %p91
      %p94 = scmp.ne.s32.totalorder %s79, %s93
      %p95 = scmp.eq.s32.totalorder %s27, 0
      %p96 = por %p94, %p95
      %s97 = ssub.s32 %s21, %s28
      %p98 = scmp.eq.s32.totalorder %s97, 0
      %s100 = sadd.s32 %s99, 1
      %s101 = scalar_select %p98, %s99, %s100
      %p104 = pneg %p98
      %p105 = scmp.eq.s32.totalorder %s21, 1
      %p106 = por %p104, %p105
      %p107 = scmp.ne.s32.totalorder %s99, %s102
      %p108 = scmp.eq.s32.totalorder %s21, 0
      %p109 = por %p107, %p108
      %p110 = scmp.ne.s32.totalorder %s99, %s102
      %p111 = scmp.eq.s32.totalorder %s26, 1
      %p112 = por %p110, %p111
      %p113 = scmp.ne.s32.totalorder %s102, %s103
      %p114 = scmp.eq.s32.totalorder %s26, 0
      %p115 = por %p113, %p114
      %p116 = scmp.ne.s32.totalorder %s102, %s103
      %p117 = scmp.eq.s32.totalorder %s27, 1
      %p118 = por %p116, %p117
      %p120 = scmp.ne.s32.totalorder %s103, %s119
      %p121 = scmp.eq.s32.totalorder %s27, 0
      %p122 = por %p120, %p121
      %s123 = ssub.s32 %s21, %s28
      %p124 = scmp.eq.s32.totalorder %s123, 0
      %s126 = sadd.s32 %s125, 1
      %s127 = scalar_select %p124, %s125, %s126
      %p130 = pneg %p124
      %p131 = scmp.eq.s32.totalorder %s21, 1
      %p132 = por %p130, %p131
      %p133 = scmp.ne.s32.totalorder %s125, %s128
      %p134 = scmp.eq.s32.totalorder %s21, 0
      %p135 = por %p133, %p134
      %p136 = scmp.ne.s32.totalorder %s125, %s128
      %p137 = scmp.eq.s32.totalorder %s26, 1
      %p138 = por %p136, %p137
      %p139 = scmp.ne.s32.totalorder %s128, %s129
      %p140 = scmp.eq.s32.totalorder %s26, 0
      %p141 = por %p139, %p140
      %p142 = scmp.ne.s32.totalorder %s128, %s129
      %p143 = scmp.eq.s32.totalorder %s27, 1
      %p144 = por %p142, %p143
      %p146 = scmp.ne.s32.totalorder %s129, %s145
      %p147 = scmp.eq.s32.totalorder %s27, 0
      %p148 = por %p146, %p147
      %p149 = scmp.le.s32.totalorder 1, %s21
      %p150 = scmp.lt.s32.totalorder %s21, 3
      %p151 = pnand %p149, %p150
      %p152 = pneg %p151
      // Predicated region
      $region9: #{tpu_custom_call.1} parent=5 // pred_check
        _
      $region10: #{tpu_custom_call.1} parent=5 // pred_check_branch
        %154 = sbr.rel (%p151) target = $region12
      $region11: #{tpu_custom_call.1} parent=5 // pred_region
        %s155 = ssub.s32 %s21, 1
        // Predicated region
        $region13: #{tpu_custom_call.1} parent=11 // pred_check
          %p156 = pneg %p68
        $region14: #{tpu_custom_call.1} parent=11 // pred_check_branch
          %158 = sbr.rel (%p156) target = $region16
        $region15: #{tpu_custom_call.1} parent=11 // pred_region
          _
        $region16: #{tpu_custom_call.1} parent=11 // pred_fallthru
          _
        // Predicated region
        $region17: #{tpu_custom_call.1} parent=11 // pred_check
          %p159 = pneg %p89
        $region18: #{tpu_custom_call.1} parent=11 // pred_check_branch
          %161 = sbr.rel (%p159) target = $region20
        $region19: #{tpu_custom_call.1} parent=11 // pred_region
          %s163 = ssub.s32 128, 128
          %164 = vsyncadd [#allocation6], %s163
          %s166 = sshll.u32 [#allocation5], 4
          %s167 = int_to_ptr.vmem [resolvable:$true] %s166
          %169 = dma.hbm_to_vmem [thread:$0]  %s2, 128, %s167, [#allocation6]
        $region20: #{tpu_custom_call.1} parent=11 // pred_fallthru
          _
      $region12: #{tpu_custom_call.1} parent=5 // pred_fallthru
        _
      %p170 = scmp.lt.s32.totalorder %s21, 2
      // Predicated region
      $region21: #{tpu_custom_call.1} parent=5 // pred_check
        %p171 = pneg %p170
      $region22: #{tpu_custom_call.1} parent=5 // pred_check_branch
        %173 = sbr.rel (%p171) target = $region24
      $region23: #{tpu_custom_call.1} parent=5 // pred_region
        // Predicated region
        $region25: #{tpu_custom_call.1} parent=23 // pred_check
          %p174 = pneg %p41
        $region26: #{tpu_custom_call.1} parent=23 // pred_check_branch
          %176 = sbr.rel (%p174) target = $region28
        $region27: #{tpu_custom_call.1} parent=23 // pred_region
          %s177 = sand.u32 %s31, 1
          %s178 = scalar_lea.sflag [#allocation3], %s177
          %s179 = sand.u32 %s31, 1
          %s180 = smul.addr %s179, 12
          %s181 = scalar_lea.vmem [#allocation2], %s180
          %s183 = ssub.s32 192, 192
          %184 = vsyncadd %s178, %s183
          %s185 = smul.addr %s21, 3
          %s186 = smul.addr %s185, 64
          %s187 = scalar_lea.hbm %s0, %s186
          %s189 = sshll.u32 %s181, 4
          %s190 = int_to_ptr.vmem [resolvable:$true] %s189
          %192 = dma.hbm_to_vmem [thread:$0]  %s187, 192, %s190, %s178
        $region28: #{tpu_custom_call.1} parent=23 // pred_fallthru
          _
      $region24: #{tpu_custom_call.1} parent=5 // pred_fallthru
        _
      %p193 = scmp.le.s32.totalorder 1, %s21
      %p194 = scmp.lt.s32.totalorder %s21, 3
      %p195 = pnand %p193, %p194
      %p196 = pneg %p195
      // Predicated region
      $region29: #{tpu_custom_call.1} parent=5 // pred_check
        _
      $region30: #{tpu_custom_call.1} parent=5 // pred_check_branch
        %198 = sbr.rel (%p195) target = $region32
      $region31: #{tpu_custom_call.1} parent=5 // pred_region
        %s199 = ssub.s32 %s21, 1
        %s200 = sand.u32 %s34, 1
        %s201 = scalar_lea.sflag [#allocation3], %s200
        %s202 = sand.u32 %s34, 1
        %s203 = smul.addr %s202, 12
        %s204 = scalar_lea.vmem [#allocation2], %s203
        // Predicated region
        $region33: #{tpu_custom_call.1} parent=31 // pred_check
          %p205 = pneg %p47
        $region34: #{tpu_custom_call.1} parent=31 // pred_check_branch
          %207 = sbr.rel (%p205) target = $region36
        $region35: #{tpu_custom_call.1} parent=31 // pred_region
          %208 = dma.done %s201, 192
        $region36: #{tpu_custom_call.1} parent=31 // pred_fallthru
          _
        // Predicated region
        $region37: #{tpu_custom_call.1} parent=31 // pred_check
          %p209 = pneg %p89
        $region38: #{tpu_custom_call.1} parent=31 // pred_check_branch
          %211 = sbr.rel (%p209) target = $region40
        $region39: #{tpu_custom_call.1} parent=31 // pred_region
          %212 = dma.done [#allocation6], 128
        $region40: #{tpu_custom_call.1} parent=31 // pred_fallthru
          _
        %s213 = sand.u32 %s34, 1
        %s214 = scalar_lea.sflag [#allocation3], %s213
        %s215 = sand.u32 %s34, 1
        %s216 = smul.addr %s215, 12
        %s217 = scalar_lea.vmem [#allocation2], %s216
        %p218 = pneg %p47
        %p219 = pneg %p44
        %p220 = pneg %p68
        %p221 = pneg %p65
        %p222 = pneg %p89
        %p223 = pneg %p86
        %p224 = pneg %p115
        %p225 = pneg %p112
        %s226 = sand.u32 %s102, 1
        %s227 = scalar_lea.sflag [#allocation4], %s226
        %s228 = sand.u32 %s102, 1
        %s229 = smul.addr %s228, 2
        %s230 = scalar_lea.vmem [#allocation7], %s229
        %p231 = pneg %p141
        %p232 = pneg %p138
        %s233 = sand.u32 %s128, 1
        %s234 = scalar_lea.sflag [#allocation9], %s233
        %s235 = sand.u32 %s128, 1
        %s236 = scalar_lea.vmem [#allocation8], %s235
        %v237 = vld [vmem:[#allocation5] ss:$4 sm:$0x3]
        %s238 = scalar_lea.vmem [#allocation5], 1
        %v239 = vld [vmem:[%s238] ss:$4 sm:$0x3]
        %s240 = scalar_lea.vmem [#allocation5], 2
        %v241 = vld [vmem:[%s240] ss:$4 sm:$0x3]
        %s242 = scalar_lea.vmem [#allocation5], 3
        %v243 = vld [vmem:[%s242] ss:$4 sm:$0x3]
        %v244 = vld [vmem:[%s204] sm:$0xff]
        %v246 = vcombine.high %v244, %v244
        %248 = vrot.lane.b32.xlu0 %v244, 1
        %v249 = vpop.permute.xlu0 %248
        %250 = vrot.lane.b32.xlu0 %v246, 1
        %v251 = vpop.permute.xlu0 %250
        %v252 = vlaneseq
        %v253 = vand.u32 %v252, 127
        %vm254 = vcmp.lt.s32.totalorder %v253, 1
        %v255 = vsel %vm254, %v249, %v251
        %v256 = vsel %vm254, %v251, %v249
        %v258 = vlaneseq
        %v259 = vshrl.u32 %v258, 7
        %v260 = vsub.s32 0, %v259
        %v261 = vrot.slane %v237, %v260
        %v262 = vlaneseq
        %v263 = vshrl.u32 %v262, 7
        %v264 = vsub.s32 1, %v263
        %v265 = vrot.slane %v237, %v264
        %v268 = vmul.f32 %v256, %v261
        %v269 = vmul.f32 %v255, %v265
        %270 = vrot.lane.b32.xlu0 %v244, 127
        %v271 = vpop.permute.xlu0 %270
        %272 = vrot.lane.b32.xlu0 %v246, 127
        %v273 = vpop.permute.xlu0 %272
        %vm274 = vcmp.lt.s32.totalorder %v253, 127
        %v275 = vsel %vm274, %v271, %v273
        %v276 = vsel %vm274, %v273, %v271
        %v278 = vlaneseq
        %v279 = vshrl.u32 %v278, 7
        %v280 = vsub.s32 0, %v279
        %v281 = vrot.slane %v239, %v280
        %v282 = vlaneseq
        %v283 = vshrl.u32 %v282, 7
        %v284 = vsub.s32 1, %v283
        %v285 = vrot.slane %v239, %v284
        %v288 = vmul.f32 %v275, %v281
        %v289 = vmul.f32 %v276, %v285
        %v290 = vld [vmem:[%s204] sm:$0xff]
        %v291 = vld [vmem:[%s204 + $0x8] sm:$0xf]
        %v294 = vcombine.high %v290, %v290
        %295 = vrot.lane.b32.xlu0 %v290, 112
        %v296 = vpop.permute.xlu0 %295
        %297 = vrot.lane.b32.xlu0 %v294, 112
        %v298 = vpop.permute.xlu0 %297
        %299 = vrot.lane.b32.xlu0 %v291, 112
        %v300 = vpop.permute.xlu0 %299
        %vm301 = vcmask 916480
        %v302 = vsel %vm301, %v296, %v298
        %v303 = vsel %vm301, %v298, %v300
        %306 = vrot.lane.b32.xlu0 %v302, 1
        %v307 = vpop.permute.xlu0 %306
        %308 = vrot.lane.b32.xlu0 %v303, 1
        %v309 = vpop.permute.xlu0 %308
        %v310 = vsel %vm254, %v307, %v309
        %v311 = vsel %vm254, %v309, %v307
        %v312 = vmul.f32 %v311, %v261
        %v313 = vmul.f32 %v310, %v265
        %314 = vrot.lane.b32.xlu0 %v302, 127
        %v315 = vpop.permute.xlu0 %314
        %316 = vrot.lane.b32.xlu0 %v303, 127
        %v317 = vpop.permute.xlu0 %316
        %v318 = vsel %vm274, %v315, %v317
        %v319 = vsel %vm274, %v317, %v315
        %v320 = vmul.f32 %v318, %v281
        %v321 = vmul.f32 %v319, %v285
        %322 = vrot.lane.b32.xlu0 %v290, 96
        %v323 = vpop.permute.xlu0 %322
        %324 = vrot.lane.b32.xlu0 %v294, 96
        %v325 = vpop.permute.xlu0 %324
        %326 = vrot.lane.b32.xlu0 %v291, 96
        %v327 = vpop.permute.xlu0 %326
        %vm328 = vcmask 785408
        %v329 = vsel %vm328, %v323, %v325
        %v330 = vsel %vm328, %v325, %v327
        %333 = vrot.lane.b32.xlu0 %v329, 1
        %v334 = vpop.permute.xlu0 %333
        %335 = vrot.lane.b32.xlu0 %v330, 1
        %v336 = vpop.permute.xlu0 %335
        %v337 = vsel %vm254, %v334, %v336
        %v338 = vsel %vm254, %v336, %v334
        %v339 = vmul.f32 %v338, %v261
        %v340 = vmul.f32 %v337, %v265
        %341 = vrot.lane.b32.xlu0 %v329, 127
        %v342 = vpop.permute.xlu0 %341
        %343 = vrot.lane.b32.xlu0 %v330, 127
        %v344 = vpop.permute.xlu0 %343
        %v345 = vsel %vm274, %v342, %v344
        %v346 = vsel %vm274, %v344, %v342
        %v347 = vmul.f32 %v345, %v281
        %v348 = vmul.f32 %v346, %v285
        %v349 = vcombine.low %v244, %v244
        %v353 = vrot.slane %v312, 4
        %v354 = vrot.slane %v313, 4
        %v359 = vrot.slane %v320, 4
        %v360 = vrot.slane %v321, 4
        %v363 = vcombine.low %v290, %v290
        %v364 = vcombine.low %v291, %v291
        %365 = vrot.lane.b32.xlu0 %v363, 96
        %v366 = vpop.permute.xlu0 %365
        %367 = vrot.lane.b32.xlu0 %v364, 96
        %v368 = vpop.permute.xlu0 %367
        %v369 = vsel %vm328, %v366, %v323
        %v370 = vsel %vm328, %v323, %v368
        %vm373 = vcmask 1043456
        %v374 = vsel %vm373, %v268, %v349
        %v375 = vsel %vm373, %v269, %v244
        %v376 = vsel %vm373, %v288, %v353
        %v377 = vsel %vm373, %v289, %v354
        %v378 = vsel %vm373, %v302, %v359
        %v379 = vsel %vm373, %v303, %v360
        %v380 = vsel %vm373, %v339, %v369
        %v381 = vsel %vm373, %v340, %v370
        %v382 = vsel %vm373, %v347, 1.0
        %v383 = vsel %vm373, %v348, 1.0
        %v384 = vld [vmem:[%s1] sm:$0x1]
        %vm385 = vcmask 302080
        %v387 = vsel %vm385, %v384, 0
        %vm389 = vcmask 1044480
        %v391 = vsel %vm389, %v382, 0
        %v394 = vsel %vm389, %v383, 0
        %396 = vmatprep.subr.mxu0 0.0
        %397 = vmatpush1.msra.mxu0 0.0
        %398 = vmatprep.subr.mxu0 0.0
        %399 = vmatpush1.msra.mxu0 0.0
        %400 = vmatprep.subr.mxu0 0.0
        %401 = vmatpush1.msra.mxu0 0.0
        %402 = vmatprep.subr.mxu0 0.0
        %403 = vmatpush1.msra.mxu0 0.0
        %404 = vmatprep.subr.mxu0 0.0
        %405 = vmatpush1.msra.mxu0 0.0
        %406 = vmatprep.subr.mxu0 0.0
        %407 = vmatpush1.msra.mxu0 0.0
        %408 = vmatprep.subr.mxu0 0.0
        %409 = vmatpush1.msra.mxu0 0.0
        %410 = vmatprep.subr.mxu0 0.0
        %411 = vmatpush1.msra.mxu0 0.0
        %412 = vmatprep.subr.mxu0 0.0
        %413 = vmatpush1.msra.mxu0 0.0
        %414 = vmatprep.subr.mxu0 0.0
        %415 = vmatpush1.msra.mxu0 0.0
        %416 = vmatprep.subr.mxu0 0.0
        %417 = vmatpush1.msra.mxu0 0.0
        %418 = vmatprep.subr.mxu0 %v394
        %419 = vmatpush1.msra.mxu0 %v391
        %420 = vmatprep.subr.mxu0 %v381
        %421 = vmatpush1.msra.mxu0 %v380
        %422 = vmatprep.subr.mxu0 %v379
        %423 = vmatpush1.msra.mxu0 %v378
        %424 = vmatprep.subr.mxu0 %v377
        %425 = vmatpush1.msra.mxu0 %v376
        %426 = vmatprep.subr.mxu0 %v375
        %427 = vmatpush1.msra.mxu0 %v374
        %428 = vmatprep.subr.mxu0 0.0
        %429 = vmatpush2.msra.mxu0 0.0
        %430 = vmatprep.subr.mxu0 0.0
        %431 = vmatpush2.msra.mxu0 0.0
        %432 = vmatprep.subr.mxu0 0.0
        %433 = vmatpush2.msra.mxu0 0.0
        %434 = vmatprep.subr.mxu0 0.0
        %435 = vmatpush2.msra.mxu0 0.0
        %436 = vmatprep.subr.mxu0 0.0
        %437 = vmatpush2.msra.mxu0 0.0
        %438 = vmatprep.subr.mxu0 0.0
        %439 = vmatpush2.msra.mxu0 0.0
        %440 = vmatprep.subr.mxu0 0.0
        %441 = vmatpush2.msra.mxu0 0.0
        %442 = vmatprep.subr.mxu0 0.0
        %443 = vmatpush2.msra.mxu0 0.0
        %444 = vmatprep.subr.mxu0 0.0
        %445 = vmatpush2.msra.mxu0 0.0
        %446 = vmatprep.subr.mxu0 0.0
        %447 = vmatpush2.msra.mxu0 0.0
        %448 = vmatprep.subr.mxu0 0.0
        %449 = vmatpush2.msra.mxu0 0.0
        %450 = vmatprep.subr.mxu0 0.0
        %451 = vmatpush2.msra.mxu0 0.0
        %452 = vmatprep.subr.mxu0 0.0
        %453 = vmatpush2.msra.mxu0 0.0
        %454 = vmatprep.subr.mxu0 0.0
        %455 = vmatpush2.msra.mxu0 0.0
        %456 = vmatprep.subr.mxu0 0.0
        %457 = vmatpush2.msra.mxu0 0.0
        %458 = vmatprep.subr.mxu0 0.0
        %459 = vmatpush2.msra.mxu0 0.0
        %460 = vmatprep.mubr.f32.mxu0 0.0
        %461 = vmatmul.mubr.f32.gmra.mxu0 %v387
        %v462 = vpop.f32.mrf.mxu0
        %v463 = vadd.f32 0.0, %v462
        %v464 = vpop.f32.mrf.mxu0
        %v465 = vadd.f32 0.0, %v464
        %466 = vdwg.mxu0
        %v467 = vmax.f32 %v463, 0.0
        %v468 = vmax.f32 %v465, 0.0
        %v471 = vcombine.low %v467, %v468
        %v473 = vunpack.c.l.s4 1966171168
        %v474 = vunpack.c.0.s8 %v473
        %v475 = vlaneseq
        %v476 = vshrl.u32 %v475, 7
        %v477 = vsub.s32 %v474, %v476
        %v478 = vrot.slane %v471, %v477
        %v480 = vunpack.c.l.s4 1966171168
        %v481 = vunpack.c.0.s8 %v480
        %v482 = vlaneseq
        %v483 = vshrl.u32 %v482, 7
        %v484 = vsub.s32 %v481, %v483
        %v485 = vrot.slane %v478, %v484
        %v487 = vlaneseq
        %vm488 = vcmp.ge.s32.totalorder %v487, 0
        %vm489 = vcmp.lt.s32.totalorder %v487, 256
        %vm490 = vmand %vm488, %vm489
        %491 = vst.msk [vmem:[%s230] sm:$0x3] %vm490, %v485
        %vm492 = vcmask 1040384
        %v493 = vsel %vm492, %v467, 0.0
        %v494 = vsel %vm492, %v468, 0.0
        %v495 = vadd.f32 %v493, %v494
        %496 = vadd.xlane.f32.xlu0 %v495
        %v497 = vpop.xlane.xlu0 %496
        %v498 = vadd.f32 %v497, 1e-08
        %v499 = vrcp.pop %v498
        %v501 = vlaneseq
        %v502 = vshrl.u32 %v501, 7
        %v503 = vsub.s32 0, %v502
        %v504 = vrot.slane %v241, %v503
        %v505 = vlaneseq
        %v506 = vshrl.u32 %v505, 7
        %v507 = vsub.s32 1, %v506
        %v508 = vrot.slane %v241, %v507
        %v511 = vmul.f32 %v467, %v504
        %v512 = vmul.f32 %v468, %v508
        %v513 = vsel %vm492, %v511, 0.0
        %v514 = vsel %vm492, %v512, 0.0
        %v515 = vadd.f32 %v513, %v514
        %516 = vadd.xlane.f32.xlu0 %v515
        %v517 = vpop.xlane.xlu0 %516
        %v518 = vmul.f32 %v517, %v499
        %v520 = vlaneseq
        %v521 = vshrl.u32 %v520, 7
        %v522 = vsub.s32 0, %v521
        %v523 = vrot.slane %v243, %v522
        %v524 = vlaneseq
        %v525 = vshrl.u32 %v524, 7
        %v526 = vsub.s32 1, %v525
        %v527 = vrot.slane %v243, %v526
        %v530 = vmul.f32 %v467, %v523
        %v531 = vmul.f32 %v468, %v527
        %v532 = vsel %vm492, %v530, 0.0
        %v533 = vsel %vm492, %v531, 0.0
        %v534 = vadd.f32 %v532, %v533
        %535 = vadd.xlane.f32.xlu0 %v534
        %v536 = vpop.xlane.xlu0 %535
        %v537 = vmul.f32 %v536, %v499
        %vm538 = vcmask 7168
        %v539 = vsel %vm538, %v518, %v537
        %vm540 = vcmask 8192
        %541 = vst.msk [vmem:[%s236] sm:$0x1] %vm540, %v539
        %s542 = sand.u32 %s102, 1
        %s543 = scalar_lea.sflag [#allocation4], %s542
        %s544 = sand.u32 %s102, 1
        %s545 = smul.addr %s544, 2
        %s546 = scalar_lea.vmem [#allocation7], %s545
        %s547 = sand.u32 %s128, 1
        %s548 = scalar_lea.sflag [#allocation9], %s547
        %s549 = sand.u32 %s128, 1
        %s550 = scalar_lea.vmem [#allocation8], %s549
        // Predicated region
        $region41: #{tpu_custom_call.1} parent=31 // pred_check
          %p551 = pneg %p112
        $region42: #{tpu_custom_call.1} parent=31 // pred_check_branch
          %553 = sbr.rel (%p551) target = $region44
        $region43: #{tpu_custom_call.1} parent=31 // pred_region
          %s555 = ssub.s32 32, 32
          %556 = vsyncadd %s543, %s555
          %s557 = smul.addr %s26, 2
          %s558 = smul.addr %s557, 16
          %s559 = scalar_lea.hbm %s3, %s558
          %s561 = sshll.u32 %s546, 4
          %s562 = int_to_ptr.vmem [resolvable:$true] %s561
          %564 = dma.vmem_to_hbm [thread:$0]  %s562, 32, %s559, %s543
        $region44: #{tpu_custom_call.1} parent=31 // pred_fallthru
          _
        // Predicated region
        $region45: #{tpu_custom_call.1} parent=31 // pred_check
          %p565 = pneg %p138
        $region46: #{tpu_custom_call.1} parent=31 // pred_check_branch
          %567 = sbr.rel (%p565) target = $region48
        $region47: #{tpu_custom_call.1} parent=31 // pred_region
          %s569 = ssub.s32 16, 16
          %570 = vsyncadd %s548, %s569
          %s571 = smul.addr %s26, 16
          %s572 = scalar_lea.hbm %s4, %s571
          %s574 = sshll.u32 %s550, 4
          %s575 = int_to_ptr.vmem [resolvable:$true] %s574
          %577 = dma.vmem_to_hbm [thread:$0]  %s575, 16, %s572, %s548
        $region48: #{tpu_custom_call.1} parent=31 // pred_fallthru
          _
      $region32: #{tpu_custom_call.1} parent=5 // pred_fallthru
        _
      %p578 = scmp.le.s32.totalorder 2, %s21
      // Predicated region
      $region49: #{tpu_custom_call.1} parent=5 // pred_check
        %p579 = pneg %p578
      $region50: #{tpu_custom_call.1} parent=5 // pred_check_branch
        %581 = sbr.rel (%p579) target = $region52
      $region51: #{tpu_custom_call.1} parent=5 // pred_region
        %s582 = ssub.s32 %s21, 2
        // Predicated region
        $region53: #{tpu_custom_call.1} parent=51 // pred_check
          %p583 = pneg %p118
        $region54: #{tpu_custom_call.1} parent=51 // pred_check_branch
          %585 = sbr.rel (%p583) target = $region56
        $region55: #{tpu_custom_call.1} parent=51 // pred_region
          %s586 = sand.u32 %s103, 1
          %s587 = scalar_lea.sflag [#allocation4], %s586
          %s588 = sand.u32 %s103, 1
          %s589 = smul.addr %s588, 2
          %s590 = scalar_lea.vmem [#allocation7], %s589
          %591 = dma.done %s587, 32
        $region56: #{tpu_custom_call.1} parent=51 // pred_fallthru
          _
        // Predicated region
        $region57: #{tpu_custom_call.1} parent=51 // pred_check
          %p592 = pneg %p144
        $region58: #{tpu_custom_call.1} parent=51 // pred_check_branch
          %594 = sbr.rel (%p592) target = $region60
        $region59: #{tpu_custom_call.1} parent=51 // pred_region
          %s595 = sand.u32 %s129, 1
          %s596 = scalar_lea.sflag [#allocation9], %s595
          %s597 = sand.u32 %s129, 1
          %s598 = scalar_lea.vmem [#allocation8], %s597
          %599 = dma.done %s596, 16
        $region60: #{tpu_custom_call.1} parent=51 // pred_fallthru
          _
      $region52: #{tpu_custom_call.1} parent=5 // pred_fallthru
        _
    $region6: #{tpu_custom_call.1} parent=1 // loop_footer
      %s25 = sadd.s32 1, %s21
    $region7: #{tpu_custom_call.1} parent=1 // loop_footer_branch
      %20 = sbr.rel target = $region3
    $region8: #{tpu_custom_call.1} parent=1 // loop_exit
      _
    %600 = vsyncpa [#allocation3], 1
    %s601 = scalar_lea.sflag [#allocation3], 1
    %602 = vsyncpa %s601, 1
    %603 = vsyncpa [#allocation6], 1
    %604 = vsyncpa [#allocation4], 1
    %s605 = scalar_lea.sflag [#allocation4], 1
    %606 = vsyncpa %s605, 1
    %607 = vsyncpa [#allocation9], 1
    %s608 = scalar_lea.sflag [#allocation9], 1
    %609 = vsyncpa %s608, 1

</llo_original>
